<compile_context>
chip_gen: v6e
topology: v6e:2x2x1
jax: 0.10.0
libtpu: 0.0.40
codegen_flags: <defaults>
</compile_context>

<pallas_src>
import jax
import jax.numpy as jnp
from jax.experimental import pallas as pl
from jax.experimental.pallas import tpu as pltpu

LANES = 128       # lane width: feature dims of layers 2..6 are zero-padded to this
NUM_SLAB = 5      # w2, w3 (lane-shifted), w34 (folded), w5, w6
NUM_BIAS = 6      # b1, b2, b3 (lane-shifted), b34 (folded), b5, b6


def _round_up(x, m):
    return ((x + m - 1) // m) * m


def autoencoder_kernel(x_ref, w1_ref, w_ref, b_ref, out_ref):
    """One batch tile.

    x_ref:  [TB, input_dim]  f32
    w1_ref: [input_dim, 128] bf16   (layer-1 weight, output lanes zero-padded)
    w_ref:  [5, 128, 128]    bf16   (w2, w3_shifted, w34, w5, w6)
    b_ref:  [6, 1, 128]      f32    (b1, b2, b3_shifted, b34, b5, b6)
    out_ref:[TB, 128]        bf16   (dec in lanes [0:out], enc in lanes [out:out+latent])
    """
    x16 = x_ref[...].astype(jnp.bfloat16)            # [TB, D_in]

    # Hoist bias loads once.
    b1 = b_ref[0]
    b2 = b_ref[1]
    b3 = b_ref[2]
    b34 = b_ref[3]
    b5 = b_ref[4]
    b6 = b_ref[5]

    # ---- encoder ----
    h = jnp.dot(x16, w1_ref[...], preferred_element_type=jnp.float32) + b1
    h = jnp.maximum(h, 0.0)
    h = jnp.dot(h.astype(jnp.bfloat16), w_ref[0],
                preferred_element_type=jnp.float32) + b2
    h = jnp.maximum(h, 0.0)
    h16 = h.astype(jnp.bfloat16)

    # enc output (off the decoder critical path); w3/b3 are packed at lane offset
    # output_dim, so enc's nonzero lanes are already at [out_dim : out_dim+latent].
    enc = jnp.dot(h16, w_ref[1], preferred_element_type=jnp.float32) + b3

    # ---- decoder (latent layer folded: relu(h @ (w3 @ w4) + (b3 @ w4 + b4))) ----
    d = jnp.dot(h16, w_ref[2], preferred_element_type=jnp.float32) + b34
    d = jnp.maximum(d, 0.0)
    d = jnp.dot(d.astype(jnp.bfloat16), w_ref[3],
                preferred_element_type=jnp.float32) + b5
    d = jnp.maximum(d, 0.0)
    dec = jnp.dot(d.astype(jnp.bfloat16), w_ref[4],
                  preferred_element_type=jnp.float32) + b6

    # dec is exactly zero in lanes >= out_dim, enc is exactly zero outside its band
    # (zero-padded weights/biases), so a plain add combines them; single unmasked
    # 128-lane bf16 store.
    out_ref[...] = (dec + enc).astype(out_ref.dtype)


def _pack_params(params, *, output_dim):
    """Fold the rank-1 latent layer and pack params into zero-padded bf16 slabs."""
    # Folded latent layer (f32 host-side).
    w34 = params["w3"] @ params["w4"]                    # [3, 3]
    b34 = params["b3"] @ params["w4"] + params["b4"]     # [1, 3]

    enc_off = output_dim   # enc columns live at lanes [output_dim : output_dim+latent]

    input_dim = params["w1"].shape[0]
    w1 = jnp.zeros((input_dim, LANES), jnp.float32)
    w1 = w1.at[:, : params["w1"].shape[1]].set(params["w1"].astype(jnp.float32))

    slab_ws = [params["w2"], params["w3"], w34, params["w5"], params["w6"]]
    slab_w_off = [0, enc_off, 0, 0, 0]
    w_slab = jnp.zeros((NUM_SLAB, LANES, LANES), jnp.float32)
    for i, (w, off) in enumerate(zip(slab_ws, slab_w_off)):
        w_slab = w_slab.at[i, : w.shape[0], off : off + w.shape[1]].set(
            w.astype(jnp.float32))

    slab_bs = [params["b1"], params["b2"], params["b3"], b34, params["b5"], params["b6"]]
    slab_b_off = [0, 0, enc_off, 0, 0, 0]
    b_slab = jnp.zeros((NUM_BIAS, 1, LANES), jnp.float32)
    for i, (b, off) in enumerate(zip(slab_bs, slab_b_off)):
        b_slab = b_slab.at[i, :, off : off + b.shape[1]].set(b.astype(jnp.float32))

    # Cast weights to bf16 AFTER zero-padding: padded lanes stay exactly zero.
    return w1.astype(jnp.bfloat16), w_slab.astype(jnp.bfloat16), b_slab


def autoencoder_forward(x, params, *, batch_tile=2048):
    """x: [batch, input_dim] float32.  Returns (enc [batch, latent], dec [batch, out])."""
    batch, input_dim = x.shape
    latent_dim = params["w3"].shape[1]
    output_dim = params["w6"].shape[1]
    assert output_dim + latent_dim <= LANES, "combined output does not fit 128 lanes"

    w1, w_slab, b_slab = _pack_params(params, output_dim=output_dim)

    # --- batch tile selection ---
    max_tb = _round_up(batch, 8)
    tb = min(_round_up(batch_tile, 8), max_tb)
    if tb >= max_tb and batch > 8:
        # The whole batch would fit in one grid step; split into >= 2 steps so
        # dimension_semantics=("parallel",) can feed both v7x TensorCores.
        tb = _round_up((batch + 1) // 2, 8)
    tb = min(tb, 4096)   # keeps double-buffered x/out + f32 intermediates well under
                         # v7x's 32 MiB scoped-VMEM default (64 MiB physical).
    batch_padded = _round_up(batch, tb)
    grid = (batch_padded // tb,)

    x = x.astype(jnp.float32)
    if batch_padded != batch:
        x_in = jnp.zeros((batch_padded, input_dim), jnp.float32).at[:batch].set(x)
    else:
        x_in = x

    # Advisory cost estimate: padded MXU work actually executed + real HBM bytes.
    flops = 2 * batch_padded * (input_dim * LANES + (NUM_SLAB) * LANES * LANES)
    bytes_accessed = int(
        x_in.size * 4 + w1.size * 2 + w_slab.size * 2 + b_slab.size * 4
        + batch_padded * LANES * 2
    )

    out = pl.pallas_call(
        autoencoder_kernel,
        out_shape=jax.ShapeDtypeStruct((batch_padded, LANES), jnp.bfloat16),
        grid_spec=pltpu.PrefetchScalarGridSpec(
            num_scalar_prefetch=0,
            grid=grid,
            in_specs=[
                # x: tiled along the batch (sublane) axis, last dim = full array dim.
                pl.BlockSpec((tb, input_dim), lambda i: (i, 0)),
                # layer-1 weight + packed slabs: constant index_map -> fetched once,
                # VMEM-resident across all grid steps.
                pl.BlockSpec((input_dim, LANES), lambda i: (0, 0)),
                pl.BlockSpec((NUM_SLAB, LANES, LANES), lambda i: (0, 0, 0)),
                pl.BlockSpec((NUM_BIAS, 1, LANES), lambda i: (0, 0, 0)),
            ],
            out_specs=pl.BlockSpec((tb, LANES), lambda i: (i, 0)),
        ),
        compiler_params=pltpu.CompilerParams(
            dimension_semantics=("parallel",),   # megacore sharding on v7x
        ),
        cost_estimate=pl.CostEstimate(
            flops=int(flops), transcendentals=0, bytes_accessed=bytes_accessed
        ),
    )(x_in, w1, w_slab, b_slab)

    # Padded-batch rows contain junk (biases through ReLU); never consume raw `out`.
    dec = out[:batch, :output_dim].astype(jnp.float32)
    enc = out[:batch, output_dim : output_dim + latent_dim].astype(jnp.float32)
    return enc, dec


def init_params(key, input_dim=10, latent_dim=1, output_dim=10):
    """Deterministic synthetic init (uniform, roughly nn.Linear scale).

    Weights stored [in_features, out_features] (transpose of PyTorch layout),
    biases stored [1, out_features]."""
    dims = [
        (input_dim, 5), (5, 3), (3, latent_dim),      # encoder
        (latent_dim, 3), (3, 5), (5, output_dim),     # decoder
    ]
    params = {}
    keys = jax.random.split(key, 2 * len(dims))
    for i, (fan_in, fan_out) in enumerate(dims):
        bound = 1.0 / jnp.sqrt(jnp.float32(fan_in))
        params[f"w{i + 1}"] = jax.random.uniform(
            keys[2 * i], (fan_in, fan_out), minval=-bound, maxval=bound,
            dtype=jnp.float32)
        params[f"b{i + 1}"] = jax.random.uniform(
            keys[2 * i + 1], (1, fan_out), minval=-bound, maxval=bound,
            dtype=jnp.float32)
    return params


def reference_forward(x, params):
    """Pure-JAX f32 reference of the original (un-folded) forward pass."""
    h = jnp.maximum(x @ params["w1"] + params["b1"], 0.0)
    h = jnp.maximum(h @ params["w2"] + params["b2"], 0.0)
    enc = h @ params["w3"] + params["b3"]
    d = jnp.maximum(enc @ params["w4"] + params["b4"], 0.0)
    d = jnp.maximum(d @ params["w5"] + params["b5"], 0.0)
    dec = d @ params["w6"] + params["b6"]
    return enc, dec


if __name__ == "__main__":
    key = jax.random.PRNGKey(0)
    k_x, k_p, k_x2 = jax.random.split(key, 3)

    batch, input_dim, latent_dim, output_dim = 8, 10, 1, 10
    x = jax.random.normal(k_x, (batch, input_dim), dtype=jnp.float32)
    params = init_params(k_p, input_dim=input_dim,
                         latent_dim=latent_dim, output_dim=output_dim)

    # Tolerances reflect the bf16 matmul path (f32 accumulation, <=10-term dots).
    ATOL = 5e-2
    RTOL = 5e-2

    # Case 1: tiny batch -> single grid step.
    enc, dec = autoencoder_forward(x, params)
    jax.block_until_ready((enc, dec))
    enc_ref, dec_ref = reference_forward(x, params)
    assert enc.shape == (batch, latent_dim)
    assert dec.shape == (batch, output_dim)
    assert jnp.allclose(enc, enc_ref, atol=ATOL, rtol=RTOL)
    assert jnp.allclose(dec, dec_ref, atol=ATOL, rtol=RTOL)

    # Case 2: default tile with batch=100 -> auto-split into 2 grid steps + batch padding.
    batch2 = 100
    x2 = jax.random.normal(k_x2, (batch2, input_dim), dtype=jnp.float32)
    enc2, dec2 = autoencoder_forward(x2, params)
    jax.block_until_ready((enc2, dec2))
    enc2_ref, dec2_ref = reference_forward(x2, params)
    assert enc2.shape == (batch2, latent_dim)
    assert dec2.shape == (batch2, output_dim)
    assert jnp.allclose(enc2, enc2_ref, atol=ATOL, rtol=RTOL)
    assert jnp.allclose(dec2, dec2_ref, atol=ATOL, rtol=RTOL)

    # Case 3: explicit small tile -> 4-step grid + padding.
    enc3, dec3 = autoencoder_forward(x2, params, batch_tile=32)
    jax.block_until_ready((enc3, dec3))
    assert jnp.allclose(enc3, enc2_ref, atol=ATOL, rtol=RTOL)
    assert jnp.allclose(dec3, dec2_ref, atol=ATOL, rtol=RTOL)

    print("KERNEL_OK")
</pallas_src>

<mosaic_0001>
module attributes {stable_mosaic.version = 11 : i64} {
  func.func @autoencoder_kernel(%arg0: i32, %arg1: memref<8x10xf32, #tpu.memory_space<vmem>>, %arg2: memref<10x128xbf16, #tpu.memory_space<vmem>>, %arg3: memref<5x128x128xbf16, #tpu.memory_space<vmem>>, %arg4: memref<6x1x128xf32, #tpu.memory_space<vmem>>, %arg5: memref<8x128xbf16, #tpu.memory_space<vmem>>) attributes {dimension_semantics = [#tpu.dimension_semantics<parallel>], iteration_bounds = array<i64: 1>, scalar_prefetch = 0 : i64, scratch_operands = 0 : i64, tpu.core_type = #tpu.core_type<tc>, window_params = [{transform_indices = @transform_0, window_bounds = array<i64: 8, 10>}, {pipeline_mode = #tpu.pipeline_mode<synchronous>, transform_indices = @transform_1, window_bounds = array<i64: 10, 128>}, {pipeline_mode = #tpu.pipeline_mode<synchronous>, transform_indices = @transform_2, window_bounds = array<i64: 5, 128, 128>}, {pipeline_mode = #tpu.pipeline_mode<synchronous>, transform_indices = @transform_3, window_bounds = array<i64: 6, 1, 128>}, {transform_indices = @transform_4, window_bounds = array<i64: 8, 128>}]} {
    %c0 = arith.constant 0 : index
    %c0_0 = arith.constant 0 : index
    %0 = vector.load %arg1[%c0, %c0_0] : memref<8x10xf32, #tpu.memory_space<vmem>>, vector<8x10xf32>
    %1 = arith.truncf %0 : vector<8x10xf32> to vector<8x10xbf16>
    %c0_1 = arith.constant 0 : index
    %c0_2 = arith.constant 0 : index
    %c0_3 = arith.constant 0 : index
    %2 = vector.load %arg4[%c0_1, %c0_2, %c0_3] : memref<6x1x128xf32, #tpu.memory_space<vmem>>, vector<1x1x128xf32>
    %3 = vector.shape_cast %2 : vector<1x1x128xf32> to vector<1x128xf32>
    %c1 = arith.constant 1 : index
    %c0_4 = arith.constant 0 : index
    %c0_5 = arith.constant 0 : index
    %4 = vector.load %arg4[%c1, %c0_4, %c0_5] : memref<6x1x128xf32, #tpu.memory_space<vmem>>, vector<1x1x128xf32>
    %5 = vector.shape_cast %4 : vector<1x1x128xf32> to vector<1x128xf32>
    %c2 = arith.constant 2 : index
    %c0_6 = arith.constant 0 : index
    %c0_7 = arith.constant 0 : index
    %6 = vector.load %arg4[%c2, %c0_6, %c0_7] : memref<6x1x128xf32, #tpu.memory_space<vmem>>, vector<1x1x128xf32>
    %7 = vector.shape_cast %6 : vector<1x1x128xf32> to vector<1x128xf32>
    %c3 = arith.constant 3 : index
    %c0_8 = arith.constant 0 : index
    %c0_9 = arith.constant 0 : index
    %8 = vector.load %arg4[%c3, %c0_8, %c0_9] : memref<6x1x128xf32, #tpu.memory_space<vmem>>, vector<1x1x128xf32>
    %9 = vector.shape_cast %8 : vector<1x1x128xf32> to vector<1x128xf32>
    %c4 = arith.constant 4 : index
    %c0_10 = arith.constant 0 : index
    %c0_11 = arith.constant 0 : index
    %10 = vector.load %arg4[%c4, %c0_10, %c0_11] : memref<6x1x128xf32, #tpu.memory_space<vmem>>, vector<1x1x128xf32>
    %11 = vector.shape_cast %10 : vector<1x1x128xf32> to vector<1x128xf32>
    %c5 = arith.constant 5 : index
    %c0_12 = arith.constant 0 : index
    %c0_13 = arith.constant 0 : index
    %12 = vector.load %arg4[%c5, %c0_12, %c0_13] : memref<6x1x128xf32, #tpu.memory_space<vmem>>, vector<1x1x128xf32>
    %13 = vector.shape_cast %12 : vector<1x1x128xf32> to vector<1x128xf32>
    %c0_14 = arith.constant 0 : index
    %c0_15 = arith.constant 0 : index
    %14 = vector.load %arg2[%c0_14, %c0_15] : memref<10x128xbf16, #tpu.memory_space<vmem>>, vector<10x128xbf16>
    %cst = arith.constant dense<0.000000e+00> : vector<8x128xf32>
    %15 = tpu.matmul %1, %14, %cst {dimension_numbers = #tpu.dot_dimension_numbers<[1], [0], [0], [1], [0, 0, 1, 1], [], []>} : vector<8x10xbf16>, vector<10x128xbf16>, vector<8x128xf32> -> vector<8x128xf32>
    %16 = vector.broadcast %3 : vector<1x128xf32> to vector<8x128xf32>
    %17 = arith.addf %15, %16 : vector<8x128xf32>
    %cst_16 = arith.constant 0.000000e+00 : f32
    %18 = vector.broadcast %cst_16 : f32 to vector<8x128xf32>
    %19 = arith.maximumf %17, %18 : vector<8x128xf32>
    %20 = arith.truncf %19 : vector<8x128xf32> to vector<8x128xbf16>
    %c0_17 = arith.constant 0 : index
    %c0_18 = arith.constant 0 : index
    %c0_19 = arith.constant 0 : index
    %21 = vector.load %arg3[%c0_17, %c0_18, %c0_19] : memref<5x128x128xbf16, #tpu.memory_space<vmem>>, vector<1x128x128xbf16>
    %22 = vector.shape_cast %21 : vector<1x128x128xbf16> to vector<128x128xbf16>
    %cst_20 = arith.constant dense<0.000000e+00> : vector<8x128xf32>
    %23 = tpu.matmul %20, %22, %cst_20 {dimension_numbers = #tpu.dot_dimension_numbers<[1], [0], [0], [1], [0, 0, 1, 1], [], []>} : vector<8x128xbf16>, vector<128x128xbf16>, vector<8x128xf32> -> vector<8x128xf32>
    %24 = vector.broadcast %5 : vector<1x128xf32> to vector<8x128xf32>
    %25 = arith.addf %23, %24 : vector<8x128xf32>
    %cst_21 = arith.constant 0.000000e+00 : f32
    %26 = vector.broadcast %cst_21 : f32 to vector<8x128xf32>
    %27 = arith.maximumf %25, %26 : vector<8x128xf32>
    %28 = arith.truncf %27 : vector<8x128xf32> to vector<8x128xbf16>
    %c1_22 = arith.constant 1 : index
    %c0_23 = arith.constant 0 : index
    %c0_24 = arith.constant 0 : index
    %29 = vector.load %arg3[%c1_22, %c0_23, %c0_24] : memref<5x128x128xbf16, #tpu.memory_space<vmem>>, vector<1x128x128xbf16>
    %30 = vector.shape_cast %29 : vector<1x128x128xbf16> to vector<128x128xbf16>
    %cst_25 = arith.constant dense<0.000000e+00> : vector<8x128xf32>
    %31 = tpu.matmul %28, %30, %cst_25 {dimension_numbers = #tpu.dot_dimension_numbers<[1], [0], [0], [1], [0, 0, 1, 1], [], []>} : vector<8x128xbf16>, vector<128x128xbf16>, vector<8x128xf32> -> vector<8x128xf32>
    %32 = vector.broadcast %7 : vector<1x128xf32> to vector<8x128xf32>
    %33 = arith.addf %31, %32 : vector<8x128xf32>
    %c2_26 = arith.constant 2 : index
    %c0_27 = arith.constant 0 : index
    %c0_28 = arith.constant 0 : index
    %34 = vector.load %arg3[%c2_26, %c0_27, %c0_28] : memref<5x128x128xbf16, #tpu.memory_space<vmem>>, vector<1x128x128xbf16>
    %35 = vector.shape_cast %34 : vector<1x128x128xbf16> to vector<128x128xbf16>
    %cst_29 = arith.constant dense<0.000000e+00> : vector<8x128xf32>
    %36 = tpu.matmul %28, %35, %cst_29 {dimension_numbers = #tpu.dot_dimension_numbers<[1], [0], [0], [1], [0, 0, 1, 1], [], []>} : vector<8x128xbf16>, vector<128x128xbf16>, vector<8x128xf32> -> vector<8x128xf32>
    %37 = vector.broadcast %9 : vector<1x128xf32> to vector<8x128xf32>
    %38 = arith.addf %36, %37 : vector<8x128xf32>
    %cst_30 = arith.constant 0.000000e+00 : f32
    %39 = vector.broadcast %cst_30 : f32 to vector<8x128xf32>
    %40 = arith.maximumf %38, %39 : vector<8x128xf32>
    %41 = arith.truncf %40 : vector<8x128xf32> to vector<8x128xbf16>
    %c3_31 = arith.constant 3 : index
    %c0_32 = arith.constant 0 : index
    %c0_33 = arith.constant 0 : index
    %42 = vector.load %arg3[%c3_31, %c0_32, %c0_33] : memref<5x128x128xbf16, #tpu.memory_space<vmem>>, vector<1x128x128xbf16>
    %43 = vector.shape_cast %42 : vector<1x128x128xbf16> to vector<128x128xbf16>
    %cst_34 = arith.constant dense<0.000000e+00> : vector<8x128xf32>
    %44 = tpu.matmul %41, %43, %cst_34 {dimension_numbers = #tpu.dot_dimension_numbers<[1], [0], [0], [1], [0, 0, 1, 1], [], []>} : vector<8x128xbf16>, vector<128x128xbf16>, vector<8x128xf32> -> vector<8x128xf32>
    %45 = vector.broadcast %11 : vector<1x128xf32> to vector<8x128xf32>
    %46 = arith.addf %44, %45 : vector<8x128xf32>
    %cst_35 = arith.constant 0.000000e+00 : f32
    %47 = vector.broadcast %cst_35 : f32 to vector<8x128xf32>
    %48 = arith.maximumf %46, %47 : vector<8x128xf32>
    %49 = arith.truncf %48 : vector<8x128xf32> to vector<8x128xbf16>
    %c4_36 = arith.constant 4 : index
    %c0_37 = arith.constant 0 : index
    %c0_38 = arith.constant 0 : index
    %50 = vector.load %arg3[%c4_36, %c0_37, %c0_38] : memref<5x128x128xbf16, #tpu.memory_space<vmem>>, vector<1x128x128xbf16>
    %51 = vector.shape_cast %50 : vector<1x128x128xbf16> to vector<128x128xbf16>
    %cst_39 = arith.constant dense<0.000000e+00> : vector<8x128xf32>
    %52 = tpu.matmul %49, %51, %cst_39 {dimension_numbers = #tpu.dot_dimension_numbers<[1], [0], [0], [1], [0, 0, 1, 1], [], []>} : vector<8x128xbf16>, vector<128x128xbf16>, vector<8x128xf32> -> vector<8x128xf32>
    %53 = vector.broadcast %13 : vector<1x128xf32> to vector<8x128xf32>
    %54 = arith.addf %52, %53 : vector<8x128xf32>
    %55 = arith.addf %54, %33 : vector<8x128xf32>
    %56 = arith.truncf %55 : vector<8x128xf32> to vector<8x128xbf16>
    %c0_40 = arith.constant 0 : index
    %c0_41 = arith.constant 0 : index
    %57 = vector.load %arg5[%c0_40, %c0_41] : memref<8x128xbf16, #tpu.memory_space<vmem>>, vector<8x128xbf16>
    tpu.vector_store %arg5[%c0_40, %c0_41], %56 {strides = array<i32>} : memref<8x128xbf16, #tpu.memory_space<vmem>>, vector<8x128xbf16>,
    return
  }
  func.func @transform_0(%arg0: i32) -> (i32, i32) {
    %c0_i32 = arith.constant 0 : i32
    %c0_i32_0 = arith.constant 0 : i32
    return %arg0, %c0_i32 : i32, i32
  }
  func.func @transform_1(%arg0: i32) -> (i32, i32) {
    %c0_i32 = arith.constant 0 : i32
    %c0_i32_0 = arith.constant 0 : i32
    %c0_i32_1 = arith.constant 0 : i32
    return %c0_i32, %c0_i32_0 : i32, i32
  }
  func.func @transform_2(%arg0: i32) -> (i32, i32, i32) {
    %c0_i32 = arith.constant 0 : i32
    %c0_i32_0 = arith.constant 0 : i32
    %c0_i32_1 = arith.constant 0 : i32
    %c0_i32_2 = arith.constant 0 : i32
    return %c0_i32, %c0_i32_0, %c0_i32_1 : i32, i32, i32
  }
  func.func @transform_3(%arg0: i32) -> (i32, i32, i32) {
    %c0_i32 = arith.constant 0 : i32
    %c0_i32_0 = arith.constant 0 : i32
    %c0_i32_1 = arith.constant 0 : i32
    %c0_i32_2 = arith.constant 0 : i32
    return %c0_i32, %c0_i32_0, %c0_i32_1 : i32, i32, i32
  }
  func.func @transform_4(%arg0: i32) -> (i32, i32) {
    %c0_i32 = arith.constant 0 : i32
    %c0_i32_0 = arith.constant 0 : i32
    return %arg0, %c0_i32 : i32, i32
  }
}

</mosaic_0001>

<llo_original>
// kernel: tpu_custom_call.1
$region0: #{tpu_custom_call.1}
  #allocation0 [shape = 'u32[]', space=smem, size = 0x4, offset = 0x4, fixed_abs, tag = 'smem constant byte address 0x4 - core index']
  #allocation1 [shape = 'u32[144,128]{1,0:T(1,128)}', space=vmem, size = 0x12000, scoped, tag = 'internal scratch']
  %s0 = inlined_call_operand.hbm [shape: f32[8,10], index: 0, kind: input, shape index: {}]
  %s1 = inlined_call_operand.hbm [shape: bf16[10,128], index: 1, kind: input, shape index: {}]
  %s2 = inlined_call_operand.hbm [shape: bf16[5,128,128], index: 2, kind: input, shape index: {}]
  %s3 = inlined_call_operand.hbm [shape: f32[6,1,128], index: 3, kind: input, shape index: {}]
  %s4 = inlined_call_operand.hbm [shape: bf16[8,128], index: 4, kind: output, shape index: {}]
  %s5 = sld [smem:[#allocation0]]
  $region42: #{tpu_custom_call.1} parent=0
    _
  %s7 = ssub.s32 1, %s5
  %s8 = scalar_select 0, %s7, %s5
  $region1: #{tpu_custom_call.1} parent=0
    #allocation2 [shape = 'u8[4096]{0}', space=vmem, size = 0x1000, scoped, tag = 'input window, operand 0, single buffered']
    #allocation3 [shape = 's32[1]{0}', space=sflag, size = 0x4, scoped, tag = 'scoped memory for tpu_custom_call.1']
    #allocation4 [shape = 's32[1]{0}', space=sflag, size = 0x4, scoped, tag = 'scoped memory for tpu_custom_call.1']
    #allocation5 [shape = 'u8[4096]{0}', space=vmem, size = 0x1000, scoped, tag = 'input window, operand 1, single buffered']
    #allocation6 [shape = 's32[1]{0}', space=sflag, size = 0x4, scoped, tag = 'scoped memory for tpu_custom_call.1']
    #allocation7 [shape = 'u8[163840]{0}', space=vmem, size = 0x28000, scoped, tag = 'input window, operand 2, single buffered']
    #allocation8 [shape = 'u8[3072]{0}', space=vmem, size = 0xc00, scoped, tag = 'input window, operand 3, single buffered']
    #allocation9 [shape = 's32[1]{0}', space=sflag, size = 0x4, scoped, tag = 'scoped memory for tpu_custom_call.1']
    #allocation10 [shape = 'u8[2048]{0}', space=vmem, size = 0x800, scoped, tag = 'output window, operand 0, single buffered']
    %9 = vsyncpa [#allocation3], 0
    %10 = vsyncpa [#allocation6], 0
    %11 = vsyncpa [#allocation9], 0
    %12 = vsyncpa [#allocation4], 0
    // Predicated region
    $region2: #{tpu_custom_call.1} parent=1 // pred_check
      _
    $region3: #{tpu_custom_call.1} parent=1 // pred_check_branch
      %14 = sbr.rel (0) target = $region5
    $region4: #{tpu_custom_call.1} parent=1 // pred_region
      %s16 = ssub.s32 128, 128
      %17 = vsyncadd [#allocation3], %s16
      %s19 = sshll.u32 [#allocation2], 4
      %s20 = int_to_ptr.vmem [resolvable:$true] %s19
      %22 = dma.hbm_to_vmem [thread:$0]  %s0, 128, %s20, [#allocation3]
    $region5: #{tpu_custom_call.1} parent=1 // pred_fallthru
      _
    // Predicated region
    $region6: #{tpu_custom_call.1} parent=1 // pred_check
      _
    $region7: #{tpu_custom_call.1} parent=1 // pred_check_branch
      %24 = sbr.rel (0) target = $region9
    $region8: #{tpu_custom_call.1} parent=1 // pred_region
      %s26 = ssub.s32 128, 128
      %27 = vsyncadd [#allocation6], %s26
      %s28 = sshll.u32 [#allocation5], 4
      %s29 = int_to_ptr.vmem [resolvable:$true] %s28
      %34 = dma.hbm_to_vmem [thread:$0]  %s1, 128, %s29, [#allocation6], 64, 64, 4
    $region9: #{tpu_custom_call.1} parent=1 // pred_fallthru
      _
    // Predicated region
    $region10: #{tpu_custom_call.1} parent=1 // pred_check
      _
    $region11: #{tpu_custom_call.1} parent=1 // pred_check_branch
      %36 = sbr.rel (0) target = $region13
    $region12: #{tpu_custom_call.1} parent=1 // pred_region
      %s38 = ssub.s32 5120, 5120
      %39 = vsyncadd [#allocation6], %s38
      %s40 = sshll.u32 [#allocation7], 4
      %s41 = int_to_ptr.vmem [resolvable:$true] %s40
      %46 = dma.hbm_to_vmem [thread:$0]  %s2, 5120, %s41, [#allocation6], 64, 64, 4
    $region13: #{tpu_custom_call.1} parent=1 // pred_fallthru
      _
    // Predicated region
    $region14: #{tpu_custom_call.1} parent=1 // pred_check
      _
    $region15: #{tpu_custom_call.1} parent=1 // pred_check_branch
      %48 = sbr.rel (0) target = $region17
    $region16: #{tpu_custom_call.1} parent=1 // pred_region
      %s50 = ssub.s32 96, 96
      %51 = vsyncadd [#allocation9], %s50
      %s52 = sshll.u32 [#allocation8], 4
      %s53 = int_to_ptr.vmem [resolvable:$true] %s52
      %58 = dma.hbm_to_vmem [thread:$0]  %s3, 96, %s53, [#allocation9], 16, 16, 1
    $region17: #{tpu_custom_call.1} parent=1 // pred_fallthru
      _
    // Predicated region
    $region18: #{tpu_custom_call.1} parent=1 // pred_check
      _
    $region19: #{tpu_custom_call.1} parent=1 // pred_check_branch
      %60 = sbr.rel (0) target = $region21
    $region20: #{tpu_custom_call.1} parent=1 // pred_region
      %61 = dma.done [#allocation3], 128
    $region21: #{tpu_custom_call.1} parent=1 // pred_fallthru
      _
    // Predicated region
    $region22: #{tpu_custom_call.1} parent=1 // pred_check
      _
    $region23: #{tpu_custom_call.1} parent=1 // pred_check_branch
      %63 = sbr.rel (0) target = $region25
    $region24: #{tpu_custom_call.1} parent=1 // pred_region
      %64 = dma.done [#allocation6], 128
    $region25: #{tpu_custom_call.1} parent=1 // pred_fallthru
      _
    // Predicated region
    $region26: #{tpu_custom_call.1} parent=1 // pred_check
      _
    $region27: #{tpu_custom_call.1} parent=1 // pred_check_branch
      %66 = sbr.rel (0) target = $region29
    $region28: #{tpu_custom_call.1} parent=1 // pred_region
      %67 = dma.done [#allocation6], 5120
    $region29: #{tpu_custom_call.1} parent=1 // pred_fallthru
      _
    // Predicated region
    $region30: #{tpu_custom_call.1} parent=1 // pred_check
      _
    $region31: #{tpu_custom_call.1} parent=1 // pred_check_branch
      %69 = sbr.rel (0) target = $region33
    $region32: #{tpu_custom_call.1} parent=1 // pred_region
      %70 = dma.done [#allocation9], 96
    $region33: #{tpu_custom_call.1} parent=1 // pred_fallthru
      _
    %v72 = vld [vmem:[#allocation2] sm:$0xff]
    %v73 = vpack.c.bf16 %v72, %v72
    %v74 = vld [vmem:[#allocation8] sm:$0x1]
    %s75 = scalar_lea.vmem [#allocation8], 1
    %v76 = vld [vmem:[%s75] sm:$0x1]
    %s77 = scalar_lea.vmem [#allocation8], 2
    %v78 = vld [vmem:[%s77] sm:$0x1]
    %s79 = scalar_lea.vmem [#allocation8], 3
    %v80 = vld [vmem:[%s79] sm:$0x1]
    %s81 = scalar_lea.vmem [#allocation8], 4
    %v82 = vld [vmem:[%s81] sm:$0x1]
    %s83 = scalar_lea.vmem [#allocation8], 5
    %v84 = vld [vmem:[%s83] sm:$0x1]
    %v85 = vld [vmem:[#allocation5] sm:$0xf]
    %v86 = vld [vmem:[#allocation5 + $0x4] sm:$0x1]
    %v88 = vlaneseq
    %v89 = vshrl.u32 %v88, 7
    %v90 = vsub.s32 0, %v89
    %v91 = vrot.slane %v74, %v90
    %v95 = vunpack.c.l.b16 %v85
    %v96 = vunpack.c.l.b16 %v86
    %v97 = vpack.c.b16 %v96, %v95
    %vm98 = vcmask 80896
    %v100 = vsel %vm98, %v73, 0
    %vm102 = vcmask 1044480
    %v104 = vsel %vm102, %v97, 0
    %106 = vmatprep.subr.bf16.mxu0 0
    %107 = vmatpush1.bf16.msra.mxu0 0
    %108 = vmatprep.subr.bf16.mxu0 0
    %109 = vmatpush1.bf16.msra.mxu0 0
    %110 = vmatprep.subr.bf16.mxu0 0
    %111 = vmatpush1.bf16.msra.mxu0 0
    %112 = vmatprep.subr.bf16.mxu0 0
    %113 = vmatpush1.bf16.msra.mxu0 0
    %114 = vmatprep.subr.bf16.mxu0 0
    %115 = vmatpush1.bf16.msra.mxu0 0
    %116 = vmatprep.subr.bf16.mxu0 0
    %117 = vmatpush1.bf16.msra.mxu0 0
    %118 = vmatprep.subr.bf16.mxu0 0
    %119 = vmatpush1.bf16.msra.mxu0 0
    %120 = vmatprep.subr.bf16.mxu0 0
    %121 = vmatpush1.bf16.msra.mxu0 %v104
    %122 = vmatprep.subr.bf16.mxu0 0
    %123 = vmatpush2.bf16.msra.mxu0 0
    %124 = vmatprep.subr.bf16.mxu0 0
    %125 = vmatpush2.bf16.msra.mxu0 0
    %126 = vmatprep.subr.bf16.mxu0 0
    %127 = vmatpush2.bf16.msra.mxu0 0
    %128 = vmatprep.subr.bf16.mxu0 0
    %129 = vmatpush2.bf16.msra.mxu0 0
    %130 = vmatprep.subr.bf16.mxu0 0
    %131 = vmatpush2.bf16.msra.mxu0 0
    %132 = vmatprep.subr.bf16.mxu0 0
    %133 = vmatpush2.bf16.msra.mxu0 0
    %134 = vmatprep.subr.bf16.mxu0 0
    %135 = vmatpush2.bf16.msra.mxu0 0
    %136 = vmatprep.subr.bf16.mxu0 0
    %137 = vmatpush2.bf16.msra.mxu0 0
    %138 = vmatprep.mubr.bf16.mxu0 0
    %139 = vmatmul.mubr.bf16.gmra.mxu0 %v100
    %v140 = vpop.f32.mrf.mxu0
    %v141 = vadd.f32 %v91, %v140
    %v142 = vpop.f32.mrf.mxu0
    %v143 = vpop.f32.mrf.mxu0
    %v144 = vpop.f32.mrf.mxu0
    %145 = vdwg.mxu0
    %v146 = vmax.f32 %v141, 0.0
    %v147 = vpack.c.bf16 %v146, %v146
    %v148 = vld [vmem:[#allocation7] sm:$0xf]
    %v149 = vld [vmem:[#allocation7 + $0x4] sm:$0xf]
    %v150 = vld [vmem:[#allocation7 + $0x8] sm:$0xf]
    %v151 = vld [vmem:[#allocation7 + $0xc] sm:$0xf]
    %v152 = vld [vmem:[#allocation7 + $0x10] sm:$0xf]
    %v153 = vld [vmem:[#allocation7 + $0x14] sm:$0xf]
    %v154 = vld [vmem:[#allocation7 + $0x18] sm:$0xf]
    %v155 = vld [vmem:[#allocation7 + $0x1c] sm:$0xf]
    %v156 = vld [vmem:[#allocation7 + $0x20] sm:$0xf]
    %v157 = vld [vmem:[#allocation7 + $0x24] sm:$0xf]
    %v158 = vld [vmem:[#allocation7 + $0x28] sm:$0xf]
    %v159 = vld [vmem:[#allocation7 + $0x2c] sm:$0xf]
    %v160 = vld [vmem:[#allocation7 + $0x30] sm:$0xf]
    %v161 = vld [vmem:[#allocation7 + $0x34] sm:$0xf]
    %v162 = vld [vmem:[#allocation7 + $0x38] sm:$0xf]
    %v163 = vld [vmem:[#allocation7 + $0x3c] sm:$0xf]
    %v165 = vlaneseq
    %v166 = vshrl.u32 %v165, 7
    %v167 = vsub.s32 0, %v166
    %v168 = vrot.slane %v76, %v167
    %v186 = vunpack.c.l.b16 %v148
    %v187 = vunpack.c.l.b16 %v149
    %v188 = vunpack.c.l.b16 %v150
    %v189 = vunpack.c.l.b16 %v151
    %v190 = vunpack.c.l.b16 %v152
    %v191 = vunpack.c.l.b16 %v153
    %v192 = vunpack.c.l.b16 %v154
    %v193 = vunpack.c.l.b16 %v155
    %v194 = vunpack.c.l.b16 %v156
    %v195 = vunpack.c.l.b16 %v157
    %v196 = vunpack.c.l.b16 %v158
    %v197 = vunpack.c.l.b16 %v159
    %v198 = vunpack.c.l.b16 %v160
    %v199 = vunpack.c.l.b16 %v161
    %v200 = vunpack.c.l.b16 %v162
    %v201 = vunpack.c.l.b16 %v163
    %v202 = vpack.c.b16 %v187, %v186
    %v203 = vpack.c.b16 %v189, %v188
    %v204 = vpack.c.b16 %v191, %v190
    %v205 = vpack.c.b16 %v193, %v192
    %v206 = vpack.c.b16 %v195, %v194
    %v207 = vpack.c.b16 %v197, %v196
    %v208 = vpack.c.b16 %v199, %v198
    %v209 = vpack.c.b16 %v201, %v200
    %218 = vmatprep.subr.bf16.mxu0 0
    %219 = vmatpush1.bf16.msra.mxu0 %v209
    %220 = vmatprep.subr.bf16.mxu0 0
    %221 = vmatpush1.bf16.msra.mxu0 %v208
    %222 = vmatprep.subr.bf16.mxu0 0
    %223 = vmatpush1.bf16.msra.mxu0 %v207
    %224 = vmatprep.subr.bf16.mxu0 0
    %225 = vmatpush1.bf16.msra.mxu0 %v206
    %226 = vmatprep.subr.bf16.mxu0 0
    %227 = vmatpush1.bf16.msra.mxu0 %v205
    %228 = vmatprep.subr.bf16.mxu0 0
    %229 = vmatpush1.bf16.msra.mxu0 %v204
    %230 = vmatprep.subr.bf16.mxu0 0
    %231 = vmatpush1.bf16.msra.mxu0 %v203
    %232 = vmatprep.subr.bf16.mxu0 0
    %233 = vmatpush1.bf16.msra.mxu0 %v202
    %234 = vmatprep.subr.bf16.mxu0 0
    %235 = vmatpush2.bf16.msra.mxu0 0
    %236 = vmatprep.subr.bf16.mxu0 0
    %237 = vmatpush2.bf16.msra.mxu0 0
    %238 = vmatprep.subr.bf16.mxu0 0
    %239 = vmatpush2.bf16.msra.mxu0 0
    %240 = vmatprep.subr.bf16.mxu0 0
    %241 = vmatpush2.bf16.msra.mxu0 0
    %242 = vmatprep.subr.bf16.mxu0 0
    %243 = vmatpush2.bf16.msra.mxu0 0
    %244 = vmatprep.subr.bf16.mxu0 0
    %245 = vmatpush2.bf16.msra.mxu0 0
    %246 = vmatprep.subr.bf16.mxu0 0
    %247 = vmatpush2.bf16.msra.mxu0 0
    %248 = vmatprep.subr.bf16.mxu0 0
    %249 = vmatpush2.bf16.msra.mxu0 0
    %250 = vmatprep.mubr.bf16.mxu0 0
    %251 = vmatmul.mubr.bf16.gmra.mxu0 %v147
    %v252 = vpop.f32.mrf.mxu0
    %v253 = vadd.f32 %v168, %v252
    %v254 = vpop.f32.mrf.mxu0
    %v255 = vpop.f32.mrf.mxu0
    %v256 = vpop.f32.mrf.mxu0
    %257 = vdwg.mxu0
    %v258 = vmax.f32 %v253, 0.0
    %v259 = vpack.c.bf16 %v258, %v258
    %s260 = scalar_lea.vmem [#allocation7], 64
    %v261 = vld [vmem:[%s260] sm:$0xf]
    %v262 = vld [vmem:[%s260 + $0x4] sm:$0xf]
    %v263 = vld [vmem:[%s260 + $0x8] sm:$0xf]
    %v264 = vld [vmem:[%s260 + $0xc] sm:$0xf]
    %v265 = vld [vmem:[%s260 + $0x10] sm:$0xf]
    %v266 = vld [vmem:[%s260 + $0x14] sm:$0xf]
    %v267 = vld [vmem:[%s260 + $0x18] sm:$0xf]
    %v268 = vld [vmem:[%s260 + $0x1c] sm:$0xf]
    %v269 = vld [vmem:[%s260 + $0x20] sm:$0xf]
    %v270 = vld [vmem:[%s260 + $0x24] sm:$0xf]
    %v271 = vld [vmem:[%s260 + $0x28] sm:$0xf]
    %v272 = vld [vmem:[%s260 + $0x2c] sm:$0xf]
    %v273 = vld [vmem:[%s260 + $0x30] sm:$0xf]
    %v274 = vld [vmem:[%s260 + $0x34] sm:$0xf]
    %v275 = vld [vmem:[%s260 + $0x38] sm:$0xf]
    %v276 = vld [vmem:[%s260 + $0x3c] sm:$0xf]
    %v278 = vlaneseq
    %v279 = vshrl.u32 %v278, 7
    %v280 = vsub.s32 0, %v279
    %v281 = vrot.slane %v78, %v280
    %v299 = vunpack.c.l.b16 %v261
    %v300 = vunpack.c.l.b16 %v262
    %v301 = vunpack.c.l.b16 %v263
    %v302 = vunpack.c.l.b16 %v264
    %v303 = vunpack.c.l.b16 %v265
    %v304 = vunpack.c.l.b16 %v266
    %v305 = vunpack.c.l.b16 %v267
    %v306 = vunpack.c.l.b16 %v268
    %v307 = vunpack.c.l.b16 %v269
    %v308 = vunpack.c.l.b16 %v270
    %v309 = vunpack.c.l.b16 %v271
    %v310 = vunpack.c.l.b16 %v272
    %v311 = vunpack.c.l.b16 %v273
    %v312 = vunpack.c.l.b16 %v274
    %v313 = vunpack.c.l.b16 %v275
    %v314 = vunpack.c.l.b16 %v276
    %v315 = vpack.c.b16 %v300, %v299
    %v316 = vpack.c.b16 %v302, %v301
    %v317 = vpack.c.b16 %v304, %v303
    %v318 = vpack.c.b16 %v306, %v305
    %v319 = vpack.c.b16 %v308, %v307
    %v320 = vpack.c.b16 %v310, %v309
    %v321 = vpack.c.b16 %v312, %v311
    %v322 = vpack.c.b16 %v314, %v313
    %331 = vmatprep.subr.bf16.mxu0 0
    %332 = vmatpush1.bf16.msra.mxu0 %v322
    %333 = vmatprep.subr.bf16.mxu0 0
    %334 = vmatpush1.bf16.msra.mxu0 %v321
    %335 = vmatprep.subr.bf16.mxu0 0
    %336 = vmatpush1.bf16.msra.mxu0 %v320
    %337 = vmatprep.subr.bf16.mxu0 0
    %338 = vmatpush1.bf16.msra.mxu0 %v319
    %339 = vmatprep.subr.bf16.mxu0 0
    %340 = vmatpush1.bf16.msra.mxu0 %v318
    %341 = vmatprep.subr.bf16.mxu0 0
    %342 = vmatpush1.bf16.msra.mxu0 %v317
    %343 = vmatprep.subr.bf16.mxu0 0
    %344 = vmatpush1.bf16.msra.mxu0 %v316
    %345 = vmatprep.subr.bf16.mxu0 0
    %346 = vmatpush1.bf16.msra.mxu0 %v315
    %347 = vmatprep.subr.bf16.mxu0 0
    %348 = vmatpush2.bf16.msra.mxu0 0
    %349 = vmatprep.subr.bf16.mxu0 0
    %350 = vmatpush2.bf16.msra.mxu0 0
    %351 = vmatprep.subr.bf16.mxu0 0
    %352 = vmatpush2.bf16.msra.mxu0 0
    %353 = vmatprep.subr.bf16.mxu0 0
    %354 = vmatpush2.bf16.msra.mxu0 0
    %355 = vmatprep.subr.bf16.mxu0 0
    %356 = vmatpush2.bf16.msra.mxu0 0
    %357 = vmatprep.subr.bf16.mxu0 0
    %358 = vmatpush2.bf16.msra.mxu0 0
    %359 = vmatprep.subr.bf16.mxu0 0
    %360 = vmatpush2.bf16.msra.mxu0 0
    %361 = vmatprep.subr.bf16.mxu0 0
    %362 = vmatpush2.bf16.msra.mxu0 0
    %363 = vmatprep.mubr.bf16.mxu0 0
    %364 = vmatmul.mubr.bf16.gmra.mxu0 %v259
    %v365 = vpop.f32.mrf.mxu0
    %v366 = vadd.f32 %v281, %v365
    %v367 = vpop.f32.mrf.mxu0
    %v368 = vpop.f32.mrf.mxu0
    %v369 = vpop.f32.mrf.mxu0
    %370 = vdwg.mxu0
    %s371 = scalar_lea.vmem [#allocation7], 128
    %v372 = vld [vmem:[%s371] sm:$0xf]
    %v373 = vld [vmem:[%s371 + $0x4] sm:$0xf]
    %v374 = vld [vmem:[%s371 + $0x8] sm:$0xf]
    %v375 = vld [vmem:[%s371 + $0xc] sm:$0xf]
    %v376 = vld [vmem:[%s371 + $0x10] sm:$0xf]
    %v377 = vld [vmem:[%s371 + $0x14] sm:$0xf]
    %v378 = vld [vmem:[%s371 + $0x18] sm:$0xf]
    %v379 = vld [vmem:[%s371 + $0x1c] sm:$0xf]
    %v380 = vld [vmem:[%s371 + $0x20] sm:$0xf]
    %v381 = vld [vmem:[%s371 + $0x24] sm:$0xf]
    %v382 = vld [vmem:[%s371 + $0x28] sm:$0xf]
    %v383 = vld [vmem:[%s371 + $0x2c] sm:$0xf]
    %v384 = vld [vmem:[%s371 + $0x30] sm:$0xf]
    %v385 = vld [vmem:[%s371 + $0x34] sm:$0xf]
    %v386 = vld [vmem:[%s371 + $0x38] sm:$0xf]
    %v387 = vld [vmem:[%s371 + $0x3c] sm:$0xf]
    %v389 = vlaneseq
    %v390 = vshrl.u32 %v389, 7
    %v391 = vsub.s32 0, %v390
    %v392 = vrot.slane %v80, %v391
    %v410 = vunpack.c.l.b16 %v372
    %v411 = vunpack.c.l.b16 %v373
    %v412 = vunpack.c.l.b16 %v374
    %v413 = vunpack.c.l.b16 %v375
    %v414 = vunpack.c.l.b16 %v376
    %v415 = vunpack.c.l.b16 %v377
    %v416 = vunpack.c.l.b16 %v378
    %v417 = vunpack.c.l.b16 %v379
    %v418 = vunpack.c.l.b16 %v380
    %v419 = vunpack.c.l.b16 %v381
    %v420 = vunpack.c.l.b16 %v382
    %v421 = vunpack.c.l.b16 %v383
    %v422 = vunpack.c.l.b16 %v384
    %v423 = vunpack.c.l.b16 %v385
    %v424 = vunpack.c.l.b16 %v386
    %v425 = vunpack.c.l.b16 %v387
    %v426 = vpack.c.b16 %v411, %v410
    %v427 = vpack.c.b16 %v413, %v412
    %v428 = vpack.c.b16 %v415, %v414
    %v429 = vpack.c.b16 %v417, %v416
    %v430 = vpack.c.b16 %v419, %v418
    %v431 = vpack.c.b16 %v421, %v420
    %v432 = vpack.c.b16 %v423, %v422
    %v433 = vpack.c.b16 %v425, %v424
    %442 = vmatprep.subr.bf16.mxu0 0
    %443 = vmatpush1.bf16.msra.mxu0 %v433
    %444 = vmatprep.subr.bf16.mxu0 0
    %445 = vmatpush1.bf16.msra.mxu0 %v432
    %446 = vmatprep.subr.bf16.mxu0 0
    %447 = vmatpush1.bf16.msra.mxu0 %v431
    %448 = vmatprep.subr.bf16.mxu0 0
    %449 = vmatpush1.bf16.msra.mxu0 %v430
    %450 = vmatprep.subr.bf16.mxu0 0
    %451 = vmatpush1.bf16.msra.mxu0 %v429
    %452 = vmatprep.subr.bf16.mxu0 0
    %453 = vmatpush1.bf16.msra.mxu0 %v428
    %454 = vmatprep.subr.bf16.mxu0 0
    %455 = vmatpush1.bf16.msra.mxu0 %v427
    %456 = vmatprep.subr.bf16.mxu0 0
    %457 = vmatpush1.bf16.msra.mxu0 %v426
    %458 = vmatprep.subr.bf16.mxu0 0
    %459 = vmatpush2.bf16.msra.mxu0 0
    %460 = vmatprep.subr.bf16.mxu0 0
    %461 = vmatpush2.bf16.msra.mxu0 0
    %462 = vmatprep.subr.bf16.mxu0 0
    %463 = vmatpush2.bf16.msra.mxu0 0
    %464 = vmatprep.subr.bf16.mxu0 0
    %465 = vmatpush2.bf16.msra.mxu0 0
    %466 = vmatprep.subr.bf16.mxu0 0
    %467 = vmatpush2.bf16.msra.mxu0 0
    %468 = vmatprep.subr.bf16.mxu0 0
    %469 = vmatpush2.bf16.msra.mxu0 0
    %470 = vmatprep.subr.bf16.mxu0 0
    %471 = vmatpush2.bf16.msra.mxu0 0
    %472 = vmatprep.subr.bf16.mxu0 0
    %473 = vmatpush2.bf16.msra.mxu0 0
    %474 = vmatprep.mubr.bf16.mxu0 0
    %475 = vmatmul.mubr.bf16.gmra.mxu0 %v259
    %v476 = vpop.f32.mrf.mxu0
    %v477 = vadd.f32 %v392, %v476
    %v478 = vpop.f32.mrf.mxu0
    %v479 = vpop.f32.mrf.mxu0
    %v480 = vpop.f32.mrf.mxu0
    %481 = vdwg.mxu0
    %v482 = vmax.f32 %v477, 0.0
    %v483 = vpack.c.bf16 %v482, %v482
    %s484 = scalar_lea.vmem [#allocation7], 192
    %v485 = vld [vmem:[%s484] sm:$0xf]
    %v486 = vld [vmem:[%s484 + $0x4] sm:$0xf]
    %v487 = vld [vmem:[%s484 + $0x8] sm:$0xf]
    %v488 = vld [vmem:[%s484 + $0xc] sm:$0xf]
    %v489 = vld [vmem:[%s484 + $0x10] sm:$0xf]
    %v490 = vld [vmem:[%s484 + $0x14] sm:$0xf]
    %v491 = vld [vmem:[%s484 + $0x18] sm:$0xf]
    %v492 = vld [vmem:[%s484 + $0x1c] sm:$0xf]
    %v493 = vld [vmem:[%s484 + $0x20] sm:$0xf]
    %v494 = vld [vmem:[%s484 + $0x24] sm:$0xf]
    %v495 = vld [vmem:[%s484 + $0x28] sm:$0xf]
    %v496 = vld [vmem:[%s484 + $0x2c] sm:$0xf]
    %v497 = vld [vmem:[%s484 + $0x30] sm:$0xf]
    %v498 = vld [vmem:[%s484 + $0x34] sm:$0xf]
    %v499 = vld [vmem:[%s484 + $0x38] sm:$0xf]
    %v500 = vld [vmem:[%s484 + $0x3c] sm:$0xf]
    %v502 = vlaneseq
    %v503 = vshrl.u32 %v502, 7
    %v504 = vsub.s32 0, %v503
    %v505 = vrot.slane %v82, %v504
    %v523 = vunpack.c.l.b16 %v485
    %v524 = vunpack.c.l.b16 %v486
    %v525 = vunpack.c.l.b16 %v487
    %v526 = vunpack.c.l.b16 %v488
    %v527 = vunpack.c.l.b16 %v489
    %v528 = vunpack.c.l.b16 %v490
    %v529 = vunpack.c.l.b16 %v491
    %v530 = vunpack.c.l.b16 %v492
    %v531 = vunpack.c.l.b16 %v493
    %v532 = vunpack.c.l.b16 %v494
    %v533 = vunpack.c.l.b16 %v495
    %v534 = vunpack.c.l.b16 %v496
    %v535 = vunpack.c.l.b16 %v497
    %v536 = vunpack.c.l.b16 %v498
    %v537 = vunpack.c.l.b16 %v499
    %v538 = vunpack.c.l.b16 %v500
    %v539 = vpack.c.b16 %v524, %v523
    %v540 = vpack.c.b16 %v526, %v525
    %v541 = vpack.c.b16 %v528, %v527
    %v542 = vpack.c.b16 %v530, %v529
    %v543 = vpack.c.b16 %v532, %v531
    %v544 = vpack.c.b16 %v534, %v533
    %v545 = vpack.c.b16 %v536, %v535
    %v546 = vpack.c.b16 %v538, %v537
    %555 = vmatprep.subr.bf16.mxu0 0
    %556 = vmatpush1.bf16.msra.mxu0 %v546
    %557 = vmatprep.subr.bf16.mxu0 0
    %558 = vmatpush1.bf16.msra.mxu0 %v545
    %559 = vmatprep.subr.bf16.mxu0 0
    %560 = vmatpush1.bf16.msra.mxu0 %v544
    %561 = vmatprep.subr.bf16.mxu0 0
    %562 = vmatpush1.bf16.msra.mxu0 %v543
    %563 = vmatprep.subr.bf16.mxu0 0
    %564 = vmatpush1.bf16.msra.mxu0 %v542
    %565 = vmatprep.subr.bf16.mxu0 0
    %566 = vmatpush1.bf16.msra.mxu0 %v541
    %567 = vmatprep.subr.bf16.mxu0 0
    %568 = vmatpush1.bf16.msra.mxu0 %v540
    %569 = vmatprep.subr.bf16.mxu0 0
    %570 = vmatpush1.bf16.msra.mxu0 %v539
    %571 = vmatprep.subr.bf16.mxu0 0
    %572 = vmatpush2.bf16.msra.mxu0 0
    %573 = vmatprep.subr.bf16.mxu0 0
    %574 = vmatpush2.bf16.msra.mxu0 0
    %575 = vmatprep.subr.bf16.mxu0 0
    %576 = vmatpush2.bf16.msra.mxu0 0
    %577 = vmatprep.subr.bf16.mxu0 0
    %578 = vmatpush2.bf16.msra.mxu0 0
    %579 = vmatprep.subr.bf16.mxu0 0
    %580 = vmatpush2.bf16.msra.mxu0 0
    %581 = vmatprep.subr.bf16.mxu0 0
    %582 = vmatpush2.bf16.msra.mxu0 0
    %583 = vmatprep.subr.bf16.mxu0 0
    %584 = vmatpush2.bf16.msra.mxu0 0
    %585 = vmatprep.subr.bf16.mxu0 0
    %586 = vmatpush2.bf16.msra.mxu0 0
    %587 = vmatprep.mubr.bf16.mxu0 0
    %588 = vmatmul.mubr.bf16.gmra.mxu0 %v483
    %v589 = vpop.f32.mrf.mxu0
    %v590 = vadd.f32 %v505, %v589
    %v591 = vpop.f32.mrf.mxu0
    %v592 = vpop.f32.mrf.mxu0
    %v593 = vpop.f32.mrf.mxu0
    %594 = vdwg.mxu0
    %v595 = vmax.f32 %v590, 0.0
    %v596 = vpack.c.bf16 %v595, %v595
    %s597 = scalar_lea.vmem [#allocation7], 256
    %v598 = vld [vmem:[%s597] sm:$0xf]
    %v599 = vld [vmem:[%s597 + $0x4] sm:$0xf]
    %v600 = vld [vmem:[%s597 + $0x8] sm:$0xf]
    %v601 = vld [vmem:[%s597 + $0xc] sm:$0xf]
    %v602 = vld [vmem:[%s597 + $0x10] sm:$0xf]
    %v603 = vld [vmem:[%s597 + $0x14] sm:$0xf]
    %v604 = vld [vmem:[%s597 + $0x18] sm:$0xf]
    %v605 = vld [vmem:[%s597 + $0x1c] sm:$0xf]
    %v606 = vld [vmem:[%s597 + $0x20] sm:$0xf]
    %v607 = vld [vmem:[%s597 + $0x24] sm:$0xf]
    %v608 = vld [vmem:[%s597 + $0x28] sm:$0xf]
    %v609 = vld [vmem:[%s597 + $0x2c] sm:$0xf]
    %v610 = vld [vmem:[%s597 + $0x30] sm:$0xf]
    %v611 = vld [vmem:[%s597 + $0x34] sm:$0xf]
    %v612 = vld [vmem:[%s597 + $0x38] sm:$0xf]
    %v613 = vld [vmem:[%s597 + $0x3c] sm:$0xf]
    %v615 = vlaneseq
    %v616 = vshrl.u32 %v615, 7
    %v617 = vsub.s32 0, %v616
    %v618 = vrot.slane %v84, %v617
    %v636 = vunpack.c.l.b16 %v598
    %v637 = vunpack.c.l.b16 %v599
    %v638 = vunpack.c.l.b16 %v600
    %v639 = vunpack.c.l.b16 %v601
    %v640 = vunpack.c.l.b16 %v602
    %v641 = vunpack.c.l.b16 %v603
    %v642 = vunpack.c.l.b16 %v604
    %v643 = vunpack.c.l.b16 %v605
    %v644 = vunpack.c.l.b16 %v606
    %v645 = vunpack.c.l.b16 %v607
    %v646 = vunpack.c.l.b16 %v608
    %v647 = vunpack.c.l.b16 %v609
    %v648 = vunpack.c.l.b16 %v610
    %v649 = vunpack.c.l.b16 %v611
    %v650 = vunpack.c.l.b16 %v612
    %v651 = vunpack.c.l.b16 %v613
    %v652 = vpack.c.b16 %v637, %v636
    %v653 = vpack.c.b16 %v639, %v638
    %v654 = vpack.c.b16 %v641, %v640
    %v655 = vpack.c.b16 %v643, %v642
    %v656 = vpack.c.b16 %v645, %v644
    %v657 = vpack.c.b16 %v647, %v646
    %v658 = vpack.c.b16 %v649, %v648
    %v659 = vpack.c.b16 %v651, %v650
    %668 = vmatprep.subr.bf16.mxu0 0
    %669 = vmatpush1.bf16.msra.mxu0 %v659
    %670 = vmatprep.subr.bf16.mxu0 0
    %671 = vmatpush1.bf16.msra.mxu0 %v658
    %672 = vmatprep.subr.bf16.mxu0 0
    %673 = vmatpush1.bf16.msra.mxu0 %v657
    %674 = vmatprep.subr.bf16.mxu0 0
    %675 = vmatpush1.bf16.msra.mxu0 %v656
    %676 = vmatprep.subr.bf16.mxu0 0
    %677 = vmatpush1.bf16.msra.mxu0 %v655
    %678 = vmatprep.subr.bf16.mxu0 0
    %679 = vmatpush1.bf16.msra.mxu0 %v654
    %680 = vmatprep.subr.bf16.mxu0 0
    %681 = vmatpush1.bf16.msra.mxu0 %v653
    %682 = vmatprep.subr.bf16.mxu0 0
    %683 = vmatpush1.bf16.msra.mxu0 %v652
    %684 = vmatprep.subr.bf16.mxu0 0
    %685 = vmatpush2.bf16.msra.mxu0 0
    %686 = vmatprep.subr.bf16.mxu0 0
    %687 = vmatpush2.bf16.msra.mxu0 0
    %688 = vmatprep.subr.bf16.mxu0 0
    %689 = vmatpush2.bf16.msra.mxu0 0
    %690 = vmatprep.subr.bf16.mxu0 0
    %691 = vmatpush2.bf16.msra.mxu0 0
    %692 = vmatprep.subr.bf16.mxu0 0
    %693 = vmatpush2.bf16.msra.mxu0 0
    %694 = vmatprep.subr.bf16.mxu0 0
    %695 = vmatpush2.bf16.msra.mxu0 0
    %696 = vmatprep.subr.bf16.mxu0 0
    %697 = vmatpush2.bf16.msra.mxu0 0
    %698 = vmatprep.subr.bf16.mxu0 0
    %699 = vmatpush2.bf16.msra.mxu0 0
    %700 = vmatprep.mubr.bf16.mxu0 0
    %701 = vmatmul.mubr.bf16.gmra.mxu0 %v596
    %v702 = vpop.f32.mrf.mxu0
    %v703 = vadd.f32 %v618, %v702
    %v704 = vpop.f32.mrf.mxu0
    %v705 = vpop.f32.mrf.mxu0
    %v706 = vpop.f32.mrf.mxu0
    %707 = vdwg.mxu0
    %v708 = vadd.f32 %v703, %v366
    %v709 = vpack.c.bf16 %v708, %v708
    %710 = vst [vmem:[#allocation10] sm:$0xf] %v709
    // Predicated region
    $region34: #{tpu_custom_call.1} parent=1 // pred_check
      _
    $region35: #{tpu_custom_call.1} parent=1 // pred_check_branch
      %712 = sbr.rel (0) target = $region37
    $region36: #{tpu_custom_call.1} parent=1 // pred_region
      %s714 = ssub.s32 64, 64
      %715 = vsyncadd [#allocation4], %s714
      %s717 = sshll.u32 [#allocation10], 4
      %s718 = int_to_ptr.vmem [resolvable:$true] %s717
      %720 = dma.vmem_to_hbm [thread:$0]  %s718, 64, %s4, [#allocation4]
    $region37: #{tpu_custom_call.1} parent=1 // pred_fallthru
      _
    // Predicated region
    $region38: #{tpu_custom_call.1} parent=1 // pred_check
      _
    $region39: #{tpu_custom_call.1} parent=1 // pred_check_branch
      %722 = sbr.rel (0) target = $region41
    $region40: #{tpu_custom_call.1} parent=1 // pred_region
      %723 = dma.done [#allocation4], 64
    $region41: #{tpu_custom_call.1} parent=1 // pred_fallthru
      _
    %724 = vsyncpa [#allocation3], 1
    %725 = vsyncpa [#allocation6], 1
    %726 = vsyncpa [#allocation9], 1
    %727 = vsyncpa [#allocation4], 1

</llo_original>
